<compile_context>
chip_gen: v5e
topology: v5e:2x2
jax: 0.10.0
libtpu: 0.0.40
codegen_flags: <defaults>
</compile_context>

<pallas_src>
import functools

import numpy as np
import jax
import jax.numpy as jnp
from jax.experimental import pallas as pl
from jax.experimental.pallas import tpu as pltpu

POOL_SIZES = (1, 2, 3, 6)
BN_EPS = 1e-5


# ----------------------------- linear-map setup ------------------------------
def _adaptive_avg_pool_matrix(in_size: int, out_size: int) -> np.ndarray:
    """1-D AdaptiveAvgPool as a (out_size, in_size) matrix (PyTorch bin rule)."""
    m = np.zeros((out_size, in_size), dtype=np.float32)
    for i in range(out_size):
        start = (i * in_size) // out_size
        end = -((-(i + 1) * in_size) // out_size)  # ceil
        m[i, start:end] = 1.0 / (end - start)
    return m


def _bilinear_upsample_matrix(out_size: int, in_size: int) -> np.ndarray:
    """1-D bilinear interpolation (align_corners=True) as (out_size, in_size)."""
    m = np.zeros((out_size, in_size), dtype=np.float32)
    for o in range(out_size):
        src = 0.0 if in_size == 1 else o * (in_size - 1) / (out_size - 1)
        i0 = min(int(np.floor(src)), in_size - 1)
        i1 = min(i0 + 1, in_size - 1)
        frac = src - i0
        m[o, i0] += 1.0 - frac
        m[o, i1] += frac
    return m


def make_params(key, C: int, H: int, W: int):
    """Deterministic synthetic parameters (conv weights + BN folded to
    scale/shift) and the fixed pooling / upsampling matrices, zero-padded per
    branch to the largest pool (padding is mathematically inert)."""
    nb = len(POOL_SIZES)
    cout = C // nb
    ppmax = max(POOL_SIZES) ** 2
    HW = H * W

    p_all = np.zeros((nb, ppmax, HW), np.float32)   # pooling:   (p*p, H*W)
    u_all = np.zeros((nb, HW, ppmax), np.float32)   # upsample:  (H*W, p*p)
    for bi, ps in enumerate(POOL_SIZES):
        ph = _adaptive_avg_pool_matrix(H, ps)
        pw = _adaptive_avg_pool_matrix(W, ps)
        uh = _bilinear_upsample_matrix(H, ps)
        uw = _bilinear_upsample_matrix(W, ps)
        p_all[bi, : ps * ps, :] = np.kron(ph, pw)
        u_all[bi, :, : ps * ps] = np.kron(uh, uw)

    keys = jax.random.split(key, 5)
    # Conv2d(C, cout, kernel_size=1, bias=False): weight (cout, C)
    conv_w = 0.3 * jax.random.normal(keys[0], (nb, cout, C), jnp.float32)

    # BatchNorm2d (inference): fold (gamma, beta, mean, var) into scale/shift
    gamma = 1.0 + 0.1 * jax.random.normal(keys[1], (nb, cout), jnp.float32)
    beta = 0.1 * jax.random.normal(keys[2], (nb, cout), jnp.float32)
    mean = 0.05 * jax.random.normal(keys[3], (nb, cout), jnp.float32)
    var = 1.0 + 0.2 * jax.random.uniform(keys[4], (nb, cout), jnp.float32)
    scale = gamma / jnp.sqrt(var + BN_EPS)
    shift = beta - mean * scale
    for bi, ps in enumerate(POOL_SIZES):
        if ps == 1:                                  # norm_layer = nn.Identity
            scale = scale.at[bi].set(1.0)
            shift = shift.at[bi].set(0.0)

    return dict(p_all=jnp.asarray(p_all), u_all=jnp.asarray(u_all),
                conv_w=conv_w, scale=scale, shift=shift)


def prepare_kernel_inputs(params):
    """Fold BN scale into conv weights, transpose/stack the linear maps for the
    NCHW-native kernel, and cast the heavy operands to bf16 (done once)."""
    p_all, u_all = params["p_all"], params["u_all"]
    conv_w, scale, shift = params["conv_w"], params["scale"], params["shift"]
    nb, ppmax, HW = p_all.shape

    # stacked transposed pooling map: column block bi is P_bi^T  -> (HW, nb*ppmax)
    pT = jnp.transpose(p_all, (2, 0, 1)).reshape(HW, nb * ppmax)
    # per-branch transposed upsampling map U_bi^T                -> (nb, ppmax, HW)
    uT = jnp.transpose(u_all, (0, 2, 1))
    # BN scale folded into the 1x1 conv weight                   -> (nb, cout, C)
    w_eff = conv_w * scale[:, :, None]
    # BN shift as a column vector for the transposed layout      -> (nb, cout, 1)
    shift_col = shift[:, :, None]

    return (pT.astype(jnp.bfloat16), uT.astype(jnp.bfloat16),
            w_eff.astype(jnp.bfloat16), shift_col.astype(jnp.float32))


# --------------------------------- kernel ------------------------------------
def psp_kernel(x_ref, pT_ref, uT_ref, w_ref, shift_ref, o_ref, *, nb, ppmax):
    x = x_ref[0]                                                    # (C, HW) bf16

    # All 4 adaptive-average-pools as one matmul: (C, HW) @ (HW, nb*ppmax)
    pooled = jnp.dot(x, pT_ref[...], preferred_element_type=jnp.float32)

    parts = []
    for bi in range(nb):                          # static loop over branches
        pb = pooled[:, bi * ppmax:(bi + 1) * ppmax].astype(jnp.bfloat16)  # (C, pp)
        # 1x1 conv (BN scale pre-folded): (cout, C) @ (C, pp)
        conv = jnp.dot(w_ref[bi], pb, preferred_element_type=jnp.float32)
        # BN shift + ReLU
        act = jnp.maximum(conv + shift_ref[bi], 0.0).astype(jnp.bfloat16)
        # bilinear upsample: (cout, pp) @ (pp, HW)   (padded rows of U^T are 0)
        parts.append(jnp.dot(act, uT_ref[bi], preferred_element_type=jnp.float32))

    parts.append(x.astype(jnp.float32))           # passthrough x (torch.cat tail)
    # one dense, lane-major (HW on lanes) store of the whole (2C, HW) block
    o_ref[0] = jnp.concatenate(parts, axis=0)


def psp_module(x_nchw, kparams):
    """x_nchw: (N, C, H, W) float32 -> (N, 2*C, H, W) float32."""
    N, C, H, W = x_nchw.shape
    nb = len(POOL_SIZES)
    cout = C // nb
    ppmax = max(POOL_SIZES) ** 2
    HW = H * W

    pT, uT, w_eff, shift = kparams

    # NCHW-native layout: channels on sublanes, spatial (HW) on lanes.
    # Pure reshape (no transpose / extra HBM pass); bf16 halves the x read.
    x_flat = x_nchw.reshape(N, C, HW).astype(jnp.bfloat16)

    kernel = functools.partial(psp_kernel, nb=nb, ppmax=ppmax)

    out = pl.pallas_call(
        kernel,
        out_shape=jax.ShapeDtypeStruct((N, 2 * C, HW), jnp.float32),
        grid_spec=pltpu.PrefetchScalarGridSpec(
            num_scalar_prefetch=0,
            grid=(N,),
            in_specs=[
                pl.BlockSpec((1, C, HW), lambda n: (n, 0, 0)),            # x
                pl.BlockSpec((HW, nb * ppmax), lambda n: (0, 0)),         # P^T stacked
                pl.BlockSpec((nb, ppmax, HW), lambda n: (0, 0, 0)),       # U^T per branch
                pl.BlockSpec((nb, cout, C), lambda n: (0, 0, 0)),         # scaled conv W
                pl.BlockSpec((nb, cout, 1), lambda n: (0, 0, 0)),         # BN shift
            ],
            out_specs=pl.BlockSpec((1, 2 * C, HW), lambda n: (n, 0, 0)),
        ),
        compiler_params=pltpu.CompilerParams(
            dimension_semantics=("parallel",)),
    )(x_flat, pT, uT, w_eff, shift)

    # (N, 2C, HW) -> (N, 2C, H, W): free reshape, channel order matches torch.cat
    return out.reshape(N, 2 * C, H, W)


# ------------------------------ pure-JAX reference ---------------------------
def psp_reference(x_nchw, params):
    """Independent fp32 reference using the raw (un-folded) parameters."""
    p_all, u_all = params["p_all"], params["u_all"]
    conv_w, scale, shift = params["conv_w"], params["scale"], params["shift"]
    N, C, H, W = x_nchw.shape
    x_flat = jnp.transpose(x_nchw, (0, 2, 3, 1)).reshape(N, H * W, C)
    outs = []
    for bi in range(len(POOL_SIZES)):
        pooled = jnp.einsum("ph,nhc->npc", p_all[bi], x_flat)
        conv = jnp.einsum("npc,oc->npo", pooled, conv_w[bi])
        act = jnp.maximum(conv * scale[bi] + shift[bi], 0.0)
        up = jnp.einsum("hp,npo->nho", u_all[bi], act)
        outs.append(jnp.transpose(up, (0, 2, 1)).reshape(N, -1, H, W))
    outs.append(x_nchw)
    return jnp.concatenate(outs, axis=1)


# ----------------------------------- main -------------------------------------
if __name__ == "__main__":
    key = jax.random.PRNGKey(0)
    kx, kp = jax.random.split(key)

    # small shapes: in_channels must be divisible by len(pool_sizes)=4
    N, C, H, W = 2, 8, 16, 16
    x = jax.random.normal(kx, (N, C, H, W), jnp.float32)
    params = make_params(kp, C, H, W)
    kparams = prepare_kernel_inputs(params)

    out = jax.block_until_ready(psp_module(x, kparams))

    assert out.shape == (N, 2 * C, H, W), out.shape
    ref = psp_reference(x, params)
    np.testing.assert_allclose(np.asarray(out), np.asarray(ref),
                               rtol=2e-2, atol=2e-2)
    print("KERNEL_OK")
</pallas_src>

<mosaic_0001>
module attributes {stable_mosaic.version = 11 : i64} {
  func.func @psp_kernel(%arg0: i32, %arg1: memref<1x8x256xbf16, #tpu.memory_space<vmem>>, %arg2: memref<256x144xbf16, #tpu.memory_space<vmem>>, %arg3: memref<4x36x256xbf16, #tpu.memory_space<vmem>>, %arg4: memref<4x2x8xbf16, #tpu.memory_space<vmem>>, %arg5: memref<4x2x1xf32, #tpu.memory_space<vmem>>, %arg6: memref<1x16x256xf32, #tpu.memory_space<vmem>>) attributes {dimension_semantics = [#tpu.dimension_semantics<parallel>], iteration_bounds = array<i64: 2>, scalar_prefetch = 0 : i64, scratch_operands = 0 : i64, tpu.core_type = #tpu.core_type<tc>, window_params = [{transform_indices = @transform_0, window_bounds = array<i64: 1, 8, 256>}, {pipeline_mode = #tpu.pipeline_mode<synchronous>, transform_indices = @transform_1, window_bounds = array<i64: 256, 144>}, {pipeline_mode = #tpu.pipeline_mode<synchronous>, transform_indices = @transform_2, window_bounds = array<i64: 4, 36, 256>}, {pipeline_mode = #tpu.pipeline_mode<synchronous>, transform_indices = @transform_3, window_bounds = array<i64: 4, 2, 8>}, {pipeline_mode = #tpu.pipeline_mode<synchronous>, transform_indices = @transform_4, window_bounds = array<i64: 4, 2, 1>}, {transform_indices = @transform_5, window_bounds = array<i64: 1, 16, 256>}]} {
    %c0 = arith.constant 0 : index
    %c0_0 = arith.constant 0 : index
    %c0_1 = arith.constant 0 : index
    %0 = vector.load %arg1[%c0, %c0_0, %c0_1] : memref<1x8x256xbf16, #tpu.memory_space<vmem>>, vector<1x8x256xbf16>
    %1 = vector.shape_cast %0 : vector<1x8x256xbf16> to vector<8x256xbf16>
    %c0_2 = arith.constant 0 : index
    %c0_3 = arith.constant 0 : index
    %2 = vector.load %arg2[%c0_2, %c0_3] : memref<256x144xbf16, #tpu.memory_space<vmem>>, vector<256x144xbf16>
    %cst = arith.constant dense<0.000000e+00> : vector<8x144xf32>
    %3 = tpu.matmul %1, %2, %cst {dimension_numbers = #tpu.dot_dimension_numbers<[1], [0], [0], [1], [0, 0, 1, 1], [], []>} : vector<8x256xbf16>, vector<256x144xbf16>, vector<8x144xf32> -> vector<8x144xf32>
    %4 = vector.extract_strided_slice %3 {offsets = [0, 0], sizes = [8, 36], strides = [1, 1]} : vector<8x144xf32> to vector<8x36xf32>
    %5 = arith.truncf %4 : vector<8x36xf32> to vector<8x36xbf16>
    %c0_4 = arith.constant 0 : index
    %c0_5 = arith.constant 0 : index
    %c0_6 = arith.constant 0 : index
    %6 = vector.load %arg4[%c0_4, %c0_5, %c0_6] : memref<4x2x8xbf16, #tpu.memory_space<vmem>>, vector<1x2x8xbf16>
    %7 = vector.shape_cast %6 : vector<1x2x8xbf16> to vector<2x8xbf16>
    %cst_7 = arith.constant dense<0.000000e+00> : vector<2x36xf32>
    %8 = tpu.matmul %7, %5, %cst_7 {dimension_numbers = #tpu.dot_dimension_numbers<[1], [0], [0], [1], [0, 0, 1, 1], [], []>} : vector<2x8xbf16>, vector<8x36xbf16>, vector<2x36xf32> -> vector<2x36xf32>
    %c0_8 = arith.constant 0 : index
    %c0_9 = arith.constant 0 : index
    %c0_10 = arith.constant 0 : index
    %9 = vector.load %arg5[%c0_8, %c0_9, %c0_10] : memref<4x2x1xf32, #tpu.memory_space<vmem>>, vector<1x2x1xf32>
    %10 = vector.shape_cast %9 : vector<1x2x1xf32> to vector<2x1xf32>
    %11 = vector.broadcast %10 : vector<2x1xf32> to vector<2x36xf32>
    %12 = arith.addf %8, %11 : vector<2x36xf32>
    %cst_11 = arith.constant 0.000000e+00 : f32
    %13 = vector.broadcast %cst_11 : f32 to vector<2x36xf32>
    %14 = arith.maximumf %12, %13 : vector<2x36xf32>
    %15 = arith.truncf %14 : vector<2x36xf32> to vector<2x36xbf16>
    %c0_12 = arith.constant 0 : index
    %c0_13 = arith.constant 0 : index
    %c0_14 = arith.constant 0 : index
    %16 = vector.load %arg3[%c0_12, %c0_13, %c0_14] : memref<4x36x256xbf16, #tpu.memory_space<vmem>>, vector<1x36x256xbf16>
    %17 = vector.shape_cast %16 : vector<1x36x256xbf16> to vector<36x256xbf16>
    %cst_15 = arith.constant dense<0.000000e+00> : vector<2x256xf32>
    %18 = tpu.matmul %15, %17, %cst_15 {dimension_numbers = #tpu.dot_dimension_numbers<[1], [0], [0], [1], [0, 0, 1, 1], [], []>} : vector<2x36xbf16>, vector<36x256xbf16>, vector<2x256xf32> -> vector<2x256xf32>
    %19 = vector.extract_strided_slice %3 {offsets = [0, 36], sizes = [8, 36], strides = [1, 1]} : vector<8x144xf32> to vector<8x36xf32>
    %20 = arith.truncf %19 : vector<8x36xf32> to vector<8x36xbf16>
    %c1 = arith.constant 1 : index
    %c0_16 = arith.constant 0 : index
    %c0_17 = arith.constant 0 : index
    %21 = vector.load %arg4[%c1, %c0_16, %c0_17] : memref<4x2x8xbf16, #tpu.memory_space<vmem>>, vector<1x2x8xbf16>
    %22 = vector.shape_cast %21 : vector<1x2x8xbf16> to vector<2x8xbf16>
    %cst_18 = arith.constant dense<0.000000e+00> : vector<2x36xf32>
    %23 = tpu.matmul %22, %20, %cst_18 {dimension_numbers = #tpu.dot_dimension_numbers<[1], [0], [0], [1], [0, 0, 1, 1], [], []>} : vector<2x8xbf16>, vector<8x36xbf16>, vector<2x36xf32> -> vector<2x36xf32>
    %c1_19 = arith.constant 1 : index
    %c0_20 = arith.constant 0 : index
    %c0_21 = arith.constant 0 : index
    %24 = vector.load %arg5[%c1_19, %c0_20, %c0_21] : memref<4x2x1xf32, #tpu.memory_space<vmem>>, vector<1x2x1xf32>
    %25 = vector.shape_cast %24 : vector<1x2x1xf32> to vector<2x1xf32>
    %26 = vector.broadcast %25 : vector<2x1xf32> to vector<2x36xf32>
    %27 = arith.addf %23, %26 : vector<2x36xf32>
    %cst_22 = arith.constant 0.000000e+00 : f32
    %28 = vector.broadcast %cst_22 : f32 to vector<2x36xf32>
    %29 = arith.maximumf %27, %28 : vector<2x36xf32>
    %30 = arith.truncf %29 : vector<2x36xf32> to vector<2x36xbf16>
    %c1_23 = arith.constant 1 : index
    %c0_24 = arith.constant 0 : index
    %c0_25 = arith.constant 0 : index
    %31 = vector.load %arg3[%c1_23, %c0_24, %c0_25] : memref<4x36x256xbf16, #tpu.memory_space<vmem>>, vector<1x36x256xbf16>
    %32 = vector.shape_cast %31 : vector<1x36x256xbf16> to vector<36x256xbf16>
    %cst_26 = arith.constant dense<0.000000e+00> : vector<2x256xf32>
    %33 = tpu.matmul %30, %32, %cst_26 {dimension_numbers = #tpu.dot_dimension_numbers<[1], [0], [0], [1], [0, 0, 1, 1], [], []>} : vector<2x36xbf16>, vector<36x256xbf16>, vector<2x256xf32> -> vector<2x256xf32>
    %34 = vector.extract_strided_slice %3 {offsets = [0, 72], sizes = [8, 36], strides = [1, 1]} : vector<8x144xf32> to vector<8x36xf32>
    %35 = arith.truncf %34 : vector<8x36xf32> to vector<8x36xbf16>
    %c2 = arith.constant 2 : index
    %c0_27 = arith.constant 0 : index
    %c0_28 = arith.constant 0 : index
    %36 = vector.load %arg4[%c2, %c0_27, %c0_28] : memref<4x2x8xbf16, #tpu.memory_space<vmem>>, vector<1x2x8xbf16>
    %37 = vector.shape_cast %36 : vector<1x2x8xbf16> to vector<2x8xbf16>
    %cst_29 = arith.constant dense<0.000000e+00> : vector<2x36xf32>
    %38 = tpu.matmul %37, %35, %cst_29 {dimension_numbers = #tpu.dot_dimension_numbers<[1], [0], [0], [1], [0, 0, 1, 1], [], []>} : vector<2x8xbf16>, vector<8x36xbf16>, vector<2x36xf32> -> vector<2x36xf32>
    %c2_30 = arith.constant 2 : index
    %c0_31 = arith.constant 0 : index
    %c0_32 = arith.constant 0 : index
    %39 = vector.load %arg5[%c2_30, %c0_31, %c0_32] : memref<4x2x1xf32, #tpu.memory_space<vmem>>, vector<1x2x1xf32>
    %40 = vector.shape_cast %39 : vector<1x2x1xf32> to vector<2x1xf32>
    %41 = vector.broadcast %40 : vector<2x1xf32> to vector<2x36xf32>
    %42 = arith.addf %38, %41 : vector<2x36xf32>
    %cst_33 = arith.constant 0.000000e+00 : f32
    %43 = vector.broadcast %cst_33 : f32 to vector<2x36xf32>
    %44 = arith.maximumf %42, %43 : vector<2x36xf32>
    %45 = arith.truncf %44 : vector<2x36xf32> to vector<2x36xbf16>
    %c2_34 = arith.constant 2 : index
    %c0_35 = arith.constant 0 : index
    %c0_36 = arith.constant 0 : index
    %46 = vector.load %arg3[%c2_34, %c0_35, %c0_36] : memref<4x36x256xbf16, #tpu.memory_space<vmem>>, vector<1x36x256xbf16>
    %47 = vector.shape_cast %46 : vector<1x36x256xbf16> to vector<36x256xbf16>
    %cst_37 = arith.constant dense<0.000000e+00> : vector<2x256xf32>
    %48 = tpu.matmul %45, %47, %cst_37 {dimension_numbers = #tpu.dot_dimension_numbers<[1], [0], [0], [1], [0, 0, 1, 1], [], []>} : vector<2x36xbf16>, vector<36x256xbf16>, vector<2x256xf32> -> vector<2x256xf32>
    %49 = vector.extract_strided_slice %3 {offsets = [0, 108], sizes = [8, 36], strides = [1, 1]} : vector<8x144xf32> to vector<8x36xf32>
    %50 = arith.truncf %49 : vector<8x36xf32> to vector<8x36xbf16>
    %c3 = arith.constant 3 : index
    %c0_38 = arith.constant 0 : index
    %c0_39 = arith.constant 0 : index
    %51 = vector.load %arg4[%c3, %c0_38, %c0_39] : memref<4x2x8xbf16, #tpu.memory_space<vmem>>, vector<1x2x8xbf16>
    %52 = vector.shape_cast %51 : vector<1x2x8xbf16> to vector<2x8xbf16>
    %cst_40 = arith.constant dense<0.000000e+00> : vector<2x36xf32>
    %53 = tpu.matmul %52, %50, %cst_40 {dimension_numbers = #tpu.dot_dimension_numbers<[1], [0], [0], [1], [0, 0, 1, 1], [], []>} : vector<2x8xbf16>, vector<8x36xbf16>, vector<2x36xf32> -> vector<2x36xf32>
    %c3_41 = arith.constant 3 : index
    %c0_42 = arith.constant 0 : index
    %c0_43 = arith.constant 0 : index
    %54 = vector.load %arg5[%c3_41, %c0_42, %c0_43] : memref<4x2x1xf32, #tpu.memory_space<vmem>>, vector<1x2x1xf32>
    %55 = vector.shape_cast %54 : vector<1x2x1xf32> to vector<2x1xf32>
    %56 = vector.broadcast %55 : vector<2x1xf32> to vector<2x36xf32>
    %57 = arith.addf %53, %56 : vector<2x36xf32>
    %cst_44 = arith.constant 0.000000e+00 : f32
    %58 = vector.broadcast %cst_44 : f32 to vector<2x36xf32>
    %59 = arith.maximumf %57, %58 : vector<2x36xf32>
    %60 = arith.truncf %59 : vector<2x36xf32> to vector<2x36xbf16>
    %c3_45 = arith.constant 3 : index
    %c0_46 = arith.constant 0 : index
    %c0_47 = arith.constant 0 : index
    %61 = vector.load %arg3[%c3_45, %c0_46, %c0_47] : memref<4x36x256xbf16, #tpu.memory_space<vmem>>, vector<1x36x256xbf16>
    %62 = vector.shape_cast %61 : vector<1x36x256xbf16> to vector<36x256xbf16>
    %cst_48 = arith.constant dense<0.000000e+00> : vector<2x256xf32>
    %63 = tpu.matmul %60, %62, %cst_48 {dimension_numbers = #tpu.dot_dimension_numbers<[1], [0], [0], [1], [0, 0, 1, 1], [], []>} : vector<2x36xbf16>, vector<36x256xbf16>, vector<2x256xf32> -> vector<2x256xf32>
    %64 = arith.extf %1 : vector<8x256xbf16> to vector<8x256xf32>
    %65 = tpu.concatenate %18, %33, %48, %63, %64 in 0 : vector<2x256xf32>, vector<2x256xf32>, vector<2x256xf32>, vector<2x256xf32>, vector<8x256xf32> -> vector<16x256xf32>
    %c0_49 = arith.constant 0 : index
    %c0_50 = arith.constant 0 : index
    %c0_51 = arith.constant 0 : index
    %66 = vector.load %arg6[%c0_49, %c0_50, %c0_51] : memref<1x16x256xf32, #tpu.memory_space<vmem>>, vector<1x16x256xf32>
    %67 = vector.shape_cast %66 : vector<1x16x256xf32> to vector<16x256xf32>
    %68 = vector.shape_cast %65 : vector<16x256xf32> to vector<1x16x256xf32>
    tpu.vector_store %arg6[%c0_49, %c0_50, %c0_51], %68 {strides = array<i32>} : memref<1x16x256xf32, #tpu.memory_space<vmem>>, vector<1x16x256xf32>,
    return
  }
  func.func @transform_0(%arg0: i32) -> (i32, i32, i32) {
    %c0_i32 = arith.constant 0 : i32
    %c0_i32_0 = arith.constant 0 : i32
    %c0_i32_1 = arith.constant 0 : i32
    return %arg0, %c0_i32, %c0_i32_0 : i32, i32, i32
  }
  func.func @transform_1(%arg0: i32) -> (i32, i32) {
    %c0_i32 = arith.constant 0 : i32
    %c0_i32_0 = arith.constant 0 : i32
    %c0_i32_1 = arith.constant 0 : i32
    return %c0_i32, %c0_i32_0 : i32, i32
  }
  func.func @transform_2(%arg0: i32) -> (i32, i32, i32) {
    %c0_i32 = arith.constant 0 : i32
    %c0_i32_0 = arith.constant 0 : i32
    %c0_i32_1 = arith.constant 0 : i32
    %c0_i32_2 = arith.constant 0 : i32
    return %c0_i32, %c0_i32_0, %c0_i32_1 : i32, i32, i32
  }
  func.func @transform_3(%arg0: i32) -> (i32, i32, i32) {
    %c0_i32 = arith.constant 0 : i32
    %c0_i32_0 = arith.constant 0 : i32
    %c0_i32_1 = arith.constant 0 : i32
    %c0_i32_2 = arith.constant 0 : i32
    return %c0_i32, %c0_i32_0, %c0_i32_1 : i32, i32, i32
  }
  func.func @transform_4(%arg0: i32) -> (i32, i32, i32) {
    %c0_i32 = arith.constant 0 : i32
    %c0_i32_0 = arith.constant 0 : i32
    %c0_i32_1 = arith.constant 0 : i32
    %c0_i32_2 = arith.constant 0 : i32
    return %c0_i32, %c0_i32_0, %c0_i32_1 : i32, i32, i32
  }
  func.func @transform_5(%arg0: i32) -> (i32, i32, i32) {
    %c0_i32 = arith.constant 0 : i32
    %c0_i32_0 = arith.constant 0 : i32
    %c0_i32_1 = arith.constant 0 : i32
    return %arg0, %c0_i32, %c0_i32_0 : i32, i32, i32
  }
}

</mosaic_0001>

<llo_original>
// kernel: tpu_custom_call.1
$region0: #{tpu_custom_call.1}
  #allocation0 [shape = 'u32[]', space=smem, size = 0x4, offset = 0x4, fixed_abs, tag = 'smem constant byte address 0x4 - core index']
  #allocation1 [shape = 'u32[72,128]{1,0:T(1,128)}', space=vmem, size = 0x9000, scoped, tag = 'internal scratch']
  %s0 = inlined_call_operand.vmem [shape: bf16[2,8,256], index: 0, kind: input, shape index: {}]
  %s1 = inlined_call_operand.vmem [shape: bf16[256,144], index: 1, kind: input, shape index: {}]
  %s2 = inlined_call_operand.vmem [shape: bf16[4,36,256], index: 2, kind: input, shape index: {}]
  %s3 = inlined_call_operand.vmem [shape: bf16[4,2,8], index: 3, kind: input, shape index: {}]
  %s4 = inlined_call_operand.vmem [shape: f32[4,2,1], index: 4, kind: input, shape index: {}]
  %s5 = inlined_call_operand.hbm [shape: f32[2,16,256], index: 5, kind: output, shape index: {}]
  %s6 = sld [smem:[#allocation0]]
  $region53: #{tpu_custom_call.1} parent=0
    _
  %s8 = ssub.s32 1, %s6
  %s9 = scalar_select 0, %s8, %s6
  $region1: #{tpu_custom_call.1} parent=0
    #allocation2 [shape = 'u8[32768]{0}', space=vmem, size = 0x8000, scoped, tag = 'output window, operand 0']
    #allocation3 [shape = 's32[2]{0}', space=sflag, size = 0x8, scoped, tag = 'scoped memory for tpu_custom_call.1']
    %10 = vsyncpa [#allocation3], 0
    %s11 = scalar_lea.sflag [#allocation3], 1
    %12 = vsyncpa %s11, 0
    loop: start=0, step=1, limit=4
    $region2: #{tpu_custom_call.1} parent=1 // loop_pre_header
      _
    $region3: #{tpu_custom_call.1} parent=1 // loop_header
      %s14 = sphi 0, %s18
      %p15 = scmp.ge.s32.totalorder %s14, 4
      %s24 = sphi 0, %s26
      %s27 = sphi 0, %s24
      %s28 = sphi 0, %s27
      %s44 = sphi 0, %s28
      %s48 = sphi 0, %s48
      %s50 = sphi 0, %s48
      %s51 = sphi 0, %s50
      %s65 = sphi 0, %s51
      %s69 = sphi 0, %s69
      %s71 = sphi 0, %s69
      %s72 = sphi 0, %s71
      %s86 = sphi 0, %s72
      %s90 = sphi 0, %s90
      %s92 = sphi 0, %s90
      %s93 = sphi 0, %s92
      %s107 = sphi 0, %s93
      %s111 = sphi 0, %s111
      %s113 = sphi 0, %s111
      %s114 = sphi 0, %s113
      %s128 = sphi 0, %s114
      %s134 = sphi 0, %s136
      %s137 = sphi 0, %s134
      %s138 = sphi 0, %s137
      %s154 = sphi 0, %s138
    $region4: #{tpu_custom_call.1} parent=1 // loop_header_branch
      %17 = sbr.rel (%p15) target = $region8
    $region5: #{tpu_custom_call.1} parent=1 // loop_body
      %s19 = ssub.s32 %s14, 1
      %s20 = ssub.s32 %s14, 2
      %s21 = sadd.s32 %s14, 1
      %s22 = ssub.s32 %s14, %s21
      %p23 = scmp.eq.s32.totalorder %s22, 0
      %s25 = sadd.s32 %s24, 1
      %s26 = scalar_select %p23, %s24, %s25
      %p29 = pneg %p23
      %p30 = scmp.eq.s32.totalorder %s14, 1
      %p31 = por %p29, %p30
      %p32 = scmp.ne.s32.totalorder %s24, %s27
      %p33 = scmp.eq.s32.totalorder %s14, 0
      %p34 = por %p32, %p33
      %p35 = scmp.ne.s32.totalorder %s24, %s27
      %p36 = scmp.eq.s32.totalorder %s19, 1
      %p37 = por %p35, %p36
      %p38 = scmp.ne.s32.totalorder %s27, %s28
      %p39 = scmp.eq.s32.totalorder %s19, 0
      %p40 = por %p38, %p39
      %p41 = scmp.ne.s32.totalorder %s27, %s28
      %p42 = scmp.eq.s32.totalorder %s20, 1
      %p43 = por %p41, %p42
      %p45 = scmp.ne.s32.totalorder %s28, %s44
      %p46 = scmp.eq.s32.totalorder %s20, 0
      %p47 = por %p45, %p46
      %s49 = sadd.s32 %s48, 1
      %p52 = scmp.eq.s32.totalorder %s14, 1
      %p53 = scmp.ne.s32.totalorder %s48, %s50
      %p54 = scmp.eq.s32.totalorder %s14, 0
      %p55 = por %p53, %p54
      %p56 = scmp.ne.s32.totalorder %s48, %s50
      %p57 = scmp.eq.s32.totalorder %s19, 1
      %p58 = por %p56, %p57
      %p59 = scmp.ne.s32.totalorder %s50, %s51
      %p60 = scmp.eq.s32.totalorder %s19, 0
      %p61 = por %p59, %p60
      %p62 = scmp.ne.s32.totalorder %s50, %s51
      %p63 = scmp.eq.s32.totalorder %s20, 1
      %p64 = por %p62, %p63
      %p66 = scmp.ne.s32.totalorder %s51, %s65
      %p67 = scmp.eq.s32.totalorder %s20, 0
      %p68 = por %p66, %p67
      %s70 = sadd.s32 %s69, 1
      %p73 = scmp.eq.s32.totalorder %s14, 1
      %p74 = scmp.ne.s32.totalorder %s69, %s71
      %p75 = scmp.eq.s32.totalorder %s14, 0
      %p76 = por %p74, %p75
      %p77 = scmp.ne.s32.totalorder %s69, %s71
      %p78 = scmp.eq.s32.totalorder %s19, 1
      %p79 = por %p77, %p78
      %p80 = scmp.ne.s32.totalorder %s71, %s72
      %p81 = scmp.eq.s32.totalorder %s19, 0
      %p82 = por %p80, %p81
      %p83 = scmp.ne.s32.totalorder %s71, %s72
      %p84 = scmp.eq.s32.totalorder %s20, 1
      %p85 = por %p83, %p84
      %p87 = scmp.ne.s32.totalorder %s72, %s86
      %p88 = scmp.eq.s32.totalorder %s20, 0
      %p89 = por %p87, %p88
      %s91 = sadd.s32 %s90, 1
      %p94 = scmp.eq.s32.totalorder %s14, 1
      %p95 = scmp.ne.s32.totalorder %s90, %s92
      %p96 = scmp.eq.s32.totalorder %s14, 0
      %p97 = por %p95, %p96
      %p98 = scmp.ne.s32.totalorder %s90, %s92
      %p99 = scmp.eq.s32.totalorder %s19, 1
      %p100 = por %p98, %p99
      %p101 = scmp.ne.s32.totalorder %s92, %s93
      %p102 = scmp.eq.s32.totalorder %s19, 0
      %p103 = por %p101, %p102
      %p104 = scmp.ne.s32.totalorder %s92, %s93
      %p105 = scmp.eq.s32.totalorder %s20, 1
      %p106 = por %p104, %p105
      %p108 = scmp.ne.s32.totalorder %s93, %s107
      %p109 = scmp.eq.s32.totalorder %s20, 0
      %p110 = por %p108, %p109
      %s112 = sadd.s32 %s111, 1
      %p115 = scmp.eq.s32.totalorder %s14, 1
      %p116 = scmp.ne.s32.totalorder %s111, %s113
      %p117 = scmp.eq.s32.totalorder %s14, 0
      %p118 = por %p116, %p117
      %p119 = scmp.ne.s32.totalorder %s111, %s113
      %p120 = scmp.eq.s32.totalorder %s19, 1
      %p121 = por %p119, %p120
      %p122 = scmp.ne.s32.totalorder %s113, %s114
      %p123 = scmp.eq.s32.totalorder %s19, 0
      %p124 = por %p122, %p123
      %p125 = scmp.ne.s32.totalorder %s113, %s114
      %p126 = scmp.eq.s32.totalorder %s20, 1
      %p127 = por %p125, %p126
      %p129 = scmp.ne.s32.totalorder %s114, %s128
      %p130 = scmp.eq.s32.totalorder %s20, 0
      %p131 = por %p129, %p130
      %s132 = ssub.s32 %s14, %s21
      %p133 = scmp.eq.s32.totalorder %s132, 0
      %s135 = sadd.s32 %s134, 1
      %s136 = scalar_select %p133, %s134, %s135
      %p139 = pneg %p133
      %p140 = scmp.eq.s32.totalorder %s14, 1
      %p141 = por %p139, %p140
      %p142 = scmp.ne.s32.totalorder %s134, %s137
      %p143 = scmp.eq.s32.totalorder %s14, 0
      %p144 = por %p142, %p143
      %p145 = scmp.ne.s32.totalorder %s134, %s137
      %p146 = scmp.eq.s32.totalorder %s19, 1
      %p147 = por %p145, %p146
      %p148 = scmp.ne.s32.totalorder %s137, %s138
      %p149 = scmp.eq.s32.totalorder %s19, 0
      %p150 = por %p148, %p149
      %p151 = scmp.ne.s32.totalorder %s137, %s138
      %p152 = scmp.eq.s32.totalorder %s20, 1
      %p153 = por %p151, %p152
      %p155 = scmp.ne.s32.totalorder %s138, %s154
      %p156 = scmp.eq.s32.totalorder %s20, 0
      %p157 = por %p155, %p156
      %p158 = scmp.le.s32.totalorder 1, %s14
      %p159 = scmp.lt.s32.totalorder %s14, 3
      %p160 = pnand %p158, %p159
      %p161 = pneg %p160
      // Predicated region
      $region9: #{tpu_custom_call.1} parent=5 // pred_check
        _
      $region10: #{tpu_custom_call.1} parent=5 // pred_check_branch
        %163 = sbr.rel (%p160) target = $region12
      $region11: #{tpu_custom_call.1} parent=5 // pred_region
        %s164 = ssub.s32 %s14, 1
        // Predicated region
        $region13: #{tpu_custom_call.1} parent=11 // pred_check
          %p165 = pneg %p61
        $region14: #{tpu_custom_call.1} parent=11 // pred_check_branch
          %167 = sbr.rel (%p165) target = $region16
        $region15: #{tpu_custom_call.1} parent=11 // pred_region
          _
        $region16: #{tpu_custom_call.1} parent=11 // pred_fallthru
          _
        // Predicated region
        $region17: #{tpu_custom_call.1} parent=11 // pred_check
          %p168 = pneg %p82
        $region18: #{tpu_custom_call.1} parent=11 // pred_check_branch
          %170 = sbr.rel (%p168) target = $region20
        $region19: #{tpu_custom_call.1} parent=11 // pred_region
          _
        $region20: #{tpu_custom_call.1} parent=11 // pred_fallthru
          _
        // Predicated region
        $region21: #{tpu_custom_call.1} parent=11 // pred_check
          %p171 = pneg %p103
        $region22: #{tpu_custom_call.1} parent=11 // pred_check_branch
          %173 = sbr.rel (%p171) target = $region24
        $region23: #{tpu_custom_call.1} parent=11 // pred_region
          _
        $region24: #{tpu_custom_call.1} parent=11 // pred_fallthru
          _
        // Predicated region
        $region25: #{tpu_custom_call.1} parent=11 // pred_check
          %p174 = pneg %p124
        $region26: #{tpu_custom_call.1} parent=11 // pred_check_branch
          %176 = sbr.rel (%p174) target = $region28
        $region27: #{tpu_custom_call.1} parent=11 // pred_region
          _
        $region28: #{tpu_custom_call.1} parent=11 // pred_fallthru
          _
      $region12: #{tpu_custom_call.1} parent=5 // pred_fallthru
        _
      %p177 = scmp.lt.s32.totalorder %s14, 2
      // Predicated region
      $region29: #{tpu_custom_call.1} parent=5 // pred_check
        %p178 = pneg %p177
      $region30: #{tpu_custom_call.1} parent=5 // pred_check_branch
        %180 = sbr.rel (%p178) target = $region32
      $region31: #{tpu_custom_call.1} parent=5 // pred_region
        // Predicated region
        $region33: #{tpu_custom_call.1} parent=31 // pred_check
          %p181 = pneg %p34
        $region34: #{tpu_custom_call.1} parent=31 // pred_check_branch
          %183 = sbr.rel (%p181) target = $region36
        $region35: #{tpu_custom_call.1} parent=31 // pred_region
          %p184 = scmp.lt.s32.totalorder %s14, 1
          %s185 = scalar_select %p184, %s14, 1
          %s186 = smul.addr %s185, 2
          %s187 = smul.addr %s186, 4
          %s188 = scalar_lea.vmem %s0, %s187
        $region36: #{tpu_custom_call.1} parent=31 // pred_fallthru
          _
      $region32: #{tpu_custom_call.1} parent=5 // pred_fallthru
        _
      %p189 = scmp.le.s32.totalorder 1, %s14
      %p190 = scmp.lt.s32.totalorder %s14, 3
      %p191 = pnand %p189, %p190
      %p192 = pneg %p191
      // Predicated region
      $region37: #{tpu_custom_call.1} parent=5 // pred_check
        _
      $region38: #{tpu_custom_call.1} parent=5 // pred_check_branch
        %194 = sbr.rel (%p191) target = $region40
      $region39: #{tpu_custom_call.1} parent=5 // pred_region
        %s195 = ssub.s32 %s14, 1
        %p196 = scmp.lt.s32.totalorder %s19, 1
        %s197 = scalar_select %p196, %s19, 1
        %s198 = smul.addr %s197, 2
        %s199 = smul.addr %s198, 4
        %s200 = scalar_lea.vmem %s0, %s199
        %p201 = pneg %p40
        %p202 = pneg %p37
        %p203 = pneg %p61
        %p204 = pneg %p58
        %p205 = pneg %p82
        %p206 = pneg %p79
        %p207 = pneg %p103
        %p208 = pneg %p100
        %p209 = pneg %p124
        %p210 = pneg %p121
        %p211 = pneg %p150
        %p212 = pneg %p147
        %s213 = sand.u32 %s137, 1
        %s214 = scalar_lea.sflag [#allocation3], %s213
        %s215 = sand.u32 %s137, 1
        %s216 = smul.addr %s215, 32
        %s217 = scalar_lea.vmem [#allocation2], %s216
        %p218 = scmp.lt.s32.totalorder %s19, 1
        %s219 = scalar_select %p218, %s19, 1
        %s220 = smul.addr %s219, 2
        %s221 = smul.addr %s220, 4
        %s222 = scalar_lea.vmem %s0, %s221
        %v224 = vld [vmem:[%s222] sm:$0xff]
        %v225 = vld [vmem:[%s1] sm:$0xff]
        %v226 = vld [vmem:[%s1 + $0x8] sm:$0xff]
        %v227 = vld [vmem:[%s1 + $0x10] sm:$0xff]
        %v228 = vld [vmem:[%s1 + $0x18] sm:$0xff]
        %v229 = vld [vmem:[%s1 + $0x20] sm:$0xff]
        %v230 = vld [vmem:[%s1 + $0x28] sm:$0xff]
        %v231 = vld [vmem:[%s1 + $0x30] sm:$0xff]
        %v232 = vld [vmem:[%s1 + $0x38] sm:$0xff]
        %v233 = vld [vmem:[%s1 + $0x40] sm:$0xff]
        %v234 = vld [vmem:[%s1 + $0x48] sm:$0xff]
        %v235 = vld [vmem:[%s1 + $0x50] sm:$0xff]
        %v236 = vld [vmem:[%s1 + $0x58] sm:$0xff]
        %v237 = vld [vmem:[%s1 + $0x60] sm:$0xff]
        %v238 = vld [vmem:[%s1 + $0x68] sm:$0xff]
        %v239 = vld [vmem:[%s1 + $0x70] sm:$0xff]
        %v240 = vld [vmem:[%s1 + $0x78] sm:$0xff]
        %v241 = vld [vmem:[%s1 + $0x80] sm:$0xff]
        %v242 = vld [vmem:[%s1 + $0x88] sm:$0xff]
        %v243 = vld [vmem:[%s1 + $0x90] sm:$0xff]
        %v244 = vld [vmem:[%s1 + $0x98] sm:$0xff]
        %v245 = vld [vmem:[%s1 + $0xa0] sm:$0xff]
        %v246 = vld [vmem:[%s1 + $0xa8] sm:$0xff]
        %v247 = vld [vmem:[%s1 + $0xb0] sm:$0xff]
        %v248 = vld [vmem:[%s1 + $0xb8] sm:$0xff]
        %v249 = vld [vmem:[%s1 + $0xc0] sm:$0xff]
        %v250 = vld [vmem:[%s1 + $0xc8] sm:$0xff]
        %v251 = vld [vmem:[%s1 + $0xd0] sm:$0xff]
        %v252 = vld [vmem:[%s1 + $0xd8] sm:$0xff]
        %v253 = vld [vmem:[%s1 + $0xe0] sm:$0xff]
        %v254 = vld [vmem:[%s1 + $0xe8] sm:$0xff]
        %v255 = vld [vmem:[%s1 + $0xf0] sm:$0xff]
        %v256 = vld [vmem:[%s1 + $0xf8] sm:$0xff]
        %v258 = vunpack.c.l.b16 %v224
        %v259 = vunpack.c.h.b16 %v224
        %v260 = vpack.c.b16 %v258, %v258
        %v261 = vpack.c.b16 %v259, %v259
        %v296 = vunpack.c.l.b16 %v225
        %v297 = vunpack.c.h.b16 %v225
        %v298 = vunpack.c.l.b16 %v226
        %v299 = vunpack.c.h.b16 %v226
        %v300 = vunpack.c.l.b16 %v227
        %v301 = vunpack.c.h.b16 %v227
        %v302 = vunpack.c.l.b16 %v228
        %v303 = vunpack.c.h.b16 %v228
        %v304 = vunpack.c.l.b16 %v229
        %v305 = vunpack.c.h.b16 %v229
        %v306 = vunpack.c.l.b16 %v230
        %v307 = vunpack.c.h.b16 %v230
        %v308 = vunpack.c.l.b16 %v231
        %v309 = vunpack.c.h.b16 %v231
        %v310 = vunpack.c.l.b16 %v232
        %v311 = vunpack.c.h.b16 %v232
        %v312 = vunpack.c.l.b16 %v233
        %v313 = vunpack.c.h.b16 %v233
        %v314 = vunpack.c.l.b16 %v234
        %v315 = vunpack.c.h.b16 %v234
        %v316 = vunpack.c.l.b16 %v235
        %v317 = vunpack.c.h.b16 %v235
        %v318 = vunpack.c.l.b16 %v236
        %v319 = vunpack.c.h.b16 %v236
        %v320 = vunpack.c.l.b16 %v237
        %v321 = vunpack.c.h.b16 %v237
        %v322 = vunpack.c.l.b16 %v238
        %v323 = vunpack.c.h.b16 %v238
        %v324 = vunpack.c.l.b16 %v239
        %v325 = vunpack.c.h.b16 %v239
        %v326 = vunpack.c.l.b16 %v240
        %v327 = vunpack.c.h.b16 %v240
        %v328 = vunpack.c.l.b16 %v241
        %v329 = vunpack.c.h.b16 %v241
        %v330 = vunpack.c.l.b16 %v242
        %v331 = vunpack.c.h.b16 %v242
        %v332 = vunpack.c.l.b16 %v243
        %v333 = vunpack.c.h.b16 %v243
        %v334 = vunpack.c.l.b16 %v244
        %v335 = vunpack.c.h.b16 %v244
        %v336 = vunpack.c.l.b16 %v245
        %v337 = vunpack.c.h.b16 %v245
        %v338 = vunpack.c.l.b16 %v246
        %v339 = vunpack.c.h.b16 %v246
        %v340 = vunpack.c.l.b16 %v247
        %v341 = vunpack.c.h.b16 %v247
        %v342 = vunpack.c.l.b16 %v248
        %v343 = vunpack.c.h.b16 %v248
        %v344 = vunpack.c.l.b16 %v249
        %v345 = vunpack.c.h.b16 %v249
        %v346 = vunpack.c.l.b16 %v250
        %v347 = vunpack.c.h.b16 %v250
        %v348 = vunpack.c.l.b16 %v251
        %v349 = vunpack.c.h.b16 %v251
        %v350 = vunpack.c.l.b16 %v252
        %v351 = vunpack.c.h.b16 %v252
        %v352 = vunpack.c.l.b16 %v253
        %v353 = vunpack.c.h.b16 %v253
        %v354 = vunpack.c.l.b16 %v254
        %v355 = vunpack.c.h.b16 %v254
        %v356 = vunpack.c.l.b16 %v255
        %v357 = vunpack.c.h.b16 %v255
        %v358 = vunpack.c.l.b16 %v256
        %v359 = vunpack.c.h.b16 %v256
        %v360 = vpack.c.b16 %v298, %v296
        %v361 = vpack.c.b16 %v299, %v297
        %v362 = vpack.c.b16 %v302, %v300
        %v363 = vpack.c.b16 %v303, %v301
        %v364 = vpack.c.b16 %v306, %v304
        %v365 = vpack.c.b16 %v307, %v305
        %v366 = vpack.c.b16 %v310, %v308
        %v367 = vpack.c.b16 %v311, %v309
        %v368 = vpack.c.b16 %v314, %v312
        %v369 = vpack.c.b16 %v315, %v313
        %v370 = vpack.c.b16 %v318, %v316
        %v371 = vpack.c.b16 %v319, %v317
        %v372 = vpack.c.b16 %v322, %v320
        %v373 = vpack.c.b16 %v323, %v321
        %v374 = vpack.c.b16 %v326, %v324
        %v375 = vpack.c.b16 %v327, %v325
        %v376 = vpack.c.b16 %v330, %v328
        %v377 = vpack.c.b16 %v331, %v329
        %v378 = vpack.c.b16 %v334, %v332
        %v379 = vpack.c.b16 %v335, %v333
        %v380 = vpack.c.b16 %v338, %v336
        %v381 = vpack.c.b16 %v339, %v337
        %v382 = vpack.c.b16 %v342, %v340
        %v383 = vpack.c.b16 %v343, %v341
        %v384 = vpack.c.b16 %v346, %v344
        %v385 = vpack.c.b16 %v347, %v345
        %v386 = vpack.c.b16 %v350, %v348
        %v387 = vpack.c.b16 %v351, %v349
        %v388 = vpack.c.b16 %v354, %v352
        %v389 = vpack.c.b16 %v355, %v353
        %v390 = vpack.c.b16 %v358, %v356
        %v391 = vpack.c.b16 %v359, %v357
        %424 = vmatpush.bf16.msra.mxu0 %v374
        %425 = vmatpush.bf16.msra.mxu0 %v372
        %426 = vmatpush.bf16.msra.mxu0 %v370
        %427 = vmatpush.bf16.msra.mxu0 %v368
        %428 = vmatpush.bf16.msra.mxu0 %v366
        %429 = vmatpush.bf16.msra.mxu0 %v364
        %430 = vmatpush.bf16.msra.mxu0 %v362
        %431 = vmatpush.bf16.msra.mxu0 %v360
        %432 = vmatmul.bf16.gmra.mxu0 %v260
        %v433 = vpop.f32.mrf.mxu0
        %v434 = vadd.f32 0.0, %v433
        %v435 = vpop.f32.mrf.mxu0
        %436 = vdwg.mxu0
        %437 = vmatpush.bf16.msra.mxu0 %v390
        %438 = vmatpush.bf16.msra.mxu0 %v388
        %439 = vmatpush.bf16.msra.mxu0 %v386
        %440 = vmatpush.bf16.msra.mxu0 %v384
        %441 = vmatpush.bf16.msra.mxu0 %v382
        %442 = vmatpush.bf16.msra.mxu0 %v380
        %443 = vmatpush.bf16.msra.mxu0 %v378
        %444 = vmatpush.bf16.msra.mxu0 %v376
        %445 = vmatmul.bf16.gmra.mxu0 %v261
        %v446 = vpop.f32.mrf.mxu0
        %v447 = vadd.f32 %v434, %v446
        %v448 = vpop.f32.mrf.mxu0
        %449 = vdwg.mxu0
        %450 = vmatpush.bf16.msra.mxu0 %v375
        %451 = vmatpush.bf16.msra.mxu0 %v373
        %452 = vmatpush.bf16.msra.mxu0 %v371
        %453 = vmatpush.bf16.msra.mxu0 %v369
        %454 = vmatpush.bf16.msra.mxu0 %v367
        %455 = vmatpush.bf16.msra.mxu0 %v365
        %456 = vmatpush.bf16.msra.mxu0 %v363
        %457 = vmatpush.bf16.msra.mxu0 %v361
        %458 = vmatmul.bf16.gmra.mxu0 %v260
        %v459 = vpop.f32.mrf.mxu0
        %v460 = vadd.f32 0.0, %v459
        %v461 = vpop.f32.mrf.mxu0
        %462 = vdwg.mxu0
        %463 = vmatpush.bf16.msra.mxu0 %v391
        %464 = vmatpush.bf16.msra.mxu0 %v389
        %465 = vmatpush.bf16.msra.mxu0 %v387
        %466 = vmatpush.bf16.msra.mxu0 %v385
        %467 = vmatpush.bf16.msra.mxu0 %v383
        %468 = vmatpush.bf16.msra.mxu0 %v381
        %469 = vmatpush.bf16.msra.mxu0 %v379
        %470 = vmatpush.bf16.msra.mxu0 %v377
        %471 = vmatmul.bf16.gmra.mxu0 %v261
        %v472 = vpop.f32.mrf.mxu0
        %v473 = vadd.f32 %v460, %v472
        %v474 = vpop.f32.mrf.mxu0
        %475 = vdwg.mxu0
        %v476 = vpack.c.bf16 %v447, %v447
        %v477 = vld [vmem:[%s3] sm:$0x1]
        %v478 = vld [vmem:[%s4] sm:$0x3]
        %480 = vset.pattern.permute.xlu0 0
        %481 = vperm.xlu0 %480, %v478
        %v482 = vpop.permute.xlu0 %481
        %vm484 = vcmask 64512
        %v486 = vsel %vm484, %v477, 0
        %vm488 = vcmask 1043456
        %v490 = vsel %vm488, %v476, 0
        %492 = vmatpush.bf16.msra.mxu0 0
        %493 = vmatpush.bf16.msra.mxu0 0
        %494 = vmatpush.bf16.msra.mxu0 0
        %495 = vmatpush.bf16.msra.mxu0 0
        %496 = vmatpush.bf16.msra.mxu0 0
        %497 = vmatpush.bf16.msra.mxu0 0
        %498 = vmatpush.bf16.msra.mxu0 0
        %499 = vmatpush.bf16.msra.mxu0 %v490
        %500 = vmatmul.bf16.gmra.mxu0 %v486
        %v501 = vpop.f32.mrf.mxu0
        %v502 = vadd.f32 %v482, %v501
        %v503 = vpop.f32.mrf.mxu0
        %504 = vdwg.mxu0
        %v505 = vmax.f32 %v502, 0.0
        %v506 = vpack.c.bf16 %v505, %v505
        %v507 = vld [vmem:[%s2] sm:$0xff]
        %v508 = vld [vmem:[%s2 + $0x8] sm:$0xff]
        %v509 = vld [vmem:[%s2 + $0x10] sm:$0xff]
        %v510 = vld [vmem:[%s2 + $0x18] sm:$0xff]
        %v511 = vld [vmem:[%s2 + $0x20] sm:$0x33]
        %v517 = vunpack.c.l.b16 %v507
        %v518 = vunpack.c.h.b16 %v507
        %v519 = vunpack.c.l.b16 %v508
        %v520 = vunpack.c.h.b16 %v508
        %v521 = vunpack.c.l.b16 %v509
        %v522 = vunpack.c.h.b16 %v509
        %v523 = vunpack.c.l.b16 %v510
        %v524 = vunpack.c.h.b16 %v510
        %v525 = vunpack.c.l.b16 %v511
        %v526 = vunpack.c.h.b16 %v511
        %v527 = vpack.c.b16 %v519, %v517
        %v528 = vpack.c.b16 %v520, %v518
        %v529 = vpack.c.b16 %v523, %v521
        %v530 = vpack.c.b16 %v524, %v522
        %v531 = vpack.c.b16 %v525, %v525
        %v532 = vpack.c.b16 %v526, %v526
        %vm537 = vcmask 293888
        %v539 = vsel %vm537, %v506, 0
        %vm541 = vcmask 1041408
        %v543 = vsel %vm541, %v531, 0
        %v546 = vsel %vm541, %v532, 0
        %548 = vmatpush.bf16.msra.mxu0 0
        %549 = vmatpush.bf16.msra.mxu0 0
        %550 = vmatpush.bf16.msra.mxu0 0
        %551 = vmatpush.bf16.msra.mxu0 0
        %552 = vmatpush.bf16.msra.mxu0 0
        %553 = vmatpush.bf16.msra.mxu0 %v543
        %554 = vmatpush.bf16.msra.mxu0 %v529
        %555 = vmatpush.bf16.msra.mxu0 %v527
        %556 = vmatmul.bf16.gmra.mxu0 %v539
        %v557 = vpop.f32.mrf.mxu0
        %v558 = vadd.f32 0.0, %v557
        %v559 = vpop.f32.mrf.mxu0
        %560 = vdwg.mxu0
        %561 = vmatpush.bf16.msra.mxu0 0
        %562 = vmatpush.bf16.msra.mxu0 0
        %563 = vmatpush.bf16.msra.mxu0 0
        %564 = vmatpush.bf16.msra.mxu0 0
        %565 = vmatpush.bf16.msra.mxu0 0
        %566 = vmatpush.bf16.msra.mxu0 %v546
        %567 = vmatpush.bf16.msra.mxu0 %v530
        %568 = vmatpush.bf16.msra.mxu0 %v528
        %569 = vmatmul.bf16.gmra.mxu0 %v539
        %v570 = vpop.f32.mrf.mxu0
        %v571 = vadd.f32 0.0, %v570
        %v572 = vpop.f32.mrf.mxu0
        %573 = vdwg.mxu0
        %s574 = scalar_lea.vmem %s3, 1
        %v575 = vld [vmem:[%s574] sm:$0x1]
        %s576 = scalar_lea.vmem %s4, 2
        %v577 = vld [vmem:[%s576] sm:$0x3]
        %579 = vset.pattern.permute.xlu0 0
        %580 = vperm.xlu0 %579, %v577
        %v581 = vpop.permute.xlu0 %580
        %584 = vrot.lane.b32.xlu0 %v476, 92
        %v585 = vpop.permute.xlu0 %584
        %v587 = vsel %vm484, %v575, 0
        %v590 = vsel %vm488, %v585, 0
        %592 = vmatpush.bf16.msra.mxu0 0
        %593 = vmatpush.bf16.msra.mxu0 0
        %594 = vmatpush.bf16.msra.mxu0 0
        %595 = vmatpush.bf16.msra.mxu0 0
        %596 = vmatpush.bf16.msra.mxu0 0
        %597 = vmatpush.bf16.msra.mxu0 0
        %598 = vmatpush.bf16.msra.mxu0 0
        %599 = vmatpush.bf16.msra.mxu0 %v590
        %600 = vmatmul.bf16.gmra.mxu0 %v587
        %v601 = vpop.f32.mrf.mxu0
        %v602 = vadd.f32 %v581, %v601
        %v603 = vpop.f32.mrf.mxu0
        %604 = vdwg.mxu0
        %v605 = vmax.f32 %v602, 0.0
        %v606 = vpack.c.bf16 %v605, %v605
        %s607 = scalar_lea.vmem %s2, 40
        %v608 = vld [vmem:[%s607] sm:$0xff]
        %v609 = vld [vmem:[%s607 + $0x8] sm:$0xff]
        %v610 = vld [vmem:[%s607 + $0x10] sm:$0xff]
        %v611 = vld [vmem:[%s607 + $0x18] sm:$0xff]
        %v612 = vld [vmem:[%s607 + $0x20] sm:$0x33]
        %v618 = vunpack.c.l.b16 %v608
        %v619 = vunpack.c.h.b16 %v608
        %v620 = vunpack.c.l.b16 %v609
        %v621 = vunpack.c.h.b16 %v609
        %v622 = vunpack.c.l.b16 %v610
        %v623 = vunpack.c.h.b16 %v610
        %v624 = vunpack.c.l.b16 %v611
        %v625 = vunpack.c.h.b16 %v611
        %v626 = vunpack.c.l.b16 %v612
        %v627 = vunpack.c.h.b16 %v612
        %v628 = vpack.c.b16 %v620, %v618
        %v629 = vpack.c.b16 %v621, %v619
        %v630 = vpack.c.b16 %v624, %v622
        %v631 = vpack.c.b16 %v625, %v623
        %v632 = vpack.c.b16 %v626, %v626
        %v633 = vpack.c.b16 %v627, %v627
        %v639 = vsel %vm537, %v606, 0
        %v642 = vsel %vm541, %v632, 0
        %v645 = vsel %vm541, %v633, 0
        %647 = vmatpush.bf16.msra.mxu0 0
        %648 = vmatpush.bf16.msra.mxu0 0
        %649 = vmatpush.bf16.msra.mxu0 0
        %650 = vmatpush.bf16.msra.mxu0 0
        %651 = vmatpush.bf16.msra.mxu0 0
        %652 = vmatpush.bf16.msra.mxu0 %v642
        %653 = vmatpush.bf16.msra.mxu0 %v630
        %654 = vmatpush.bf16.msra.mxu0 %v628
        %655 = vmatmul.bf16.gmra.mxu0 %v639
        %v656 = vpop.f32.mrf.mxu0
        %v657 = vadd.f32 0.0, %v656
        %v658 = vpop.f32.mrf.mxu0
        %659 = vdwg.mxu0
        %660 = vmatpush.bf16.msra.mxu0 0
        %661 = vmatpush.bf16.msra.mxu0 0
        %662 = vmatpush.bf16.msra.mxu0 0
        %663 = vmatpush.bf16.msra.mxu0 0
        %664 = vmatpush.bf16.msra.mxu0 0
        %665 = vmatpush.bf16.msra.mxu0 %v645
        %666 = vmatpush.bf16.msra.mxu0 %v631
        %667 = vmatpush.bf16.msra.mxu0 %v629
        %668 = vmatmul.bf16.gmra.mxu0 %v639
        %v669 = vpop.f32.mrf.mxu0
        %v670 = vadd.f32 0.0, %v669
        %v671 = vpop.f32.mrf.mxu0
        %672 = vdwg.mxu0
        %s673 = scalar_lea.vmem %s3, 2
        %v674 = vld [vmem:[%s673] sm:$0x1]
        %s675 = scalar_lea.vmem %s4, 4
        %v676 = vld [vmem:[%s675] sm:$0x3]
        %678 = vset.pattern.permute.xlu0 0
        %679 = vperm.xlu0 %678, %v676
        %v680 = vpop.permute.xlu0 %679
        %682 = vrot.lane.b32.xlu0 %v476, 56
        %v683 = vpop.permute.xlu0 %682
        %v685 = vsel %vm484, %v674, 0
        %v688 = vsel %vm488, %v683, 0
        %690 = vmatpush.bf16.msra.mxu0 0
        %691 = vmatpush.bf16.msra.mxu0 0
        %692 = vmatpush.bf16.msra.mxu0 0
        %693 = vmatpush.bf16.msra.mxu0 0
        %694 = vmatpush.bf16.msra.mxu0 0
        %695 = vmatpush.bf16.msra.mxu0 0
        %696 = vmatpush.bf16.msra.mxu0 0
        %697 = vmatpush.bf16.msra.mxu0 %v688
        %698 = vmatmul.bf16.gmra.mxu0 %v685
        %v699 = vpop.f32.mrf.mxu0
        %v700 = vadd.f32 %v680, %v699
        %v701 = vpop.f32.mrf.mxu0
        %702 = vdwg.mxu0
        %v703 = vmax.f32 %v700, 0.0
        %v704 = vpack.c.bf16 %v703, %v703
        %s705 = scalar_lea.vmem %s2, 80
        %v706 = vld [vmem:[%s705] sm:$0xff]
        %v707 = vld [vmem:[%s705 + $0x8] sm:$0xff]
        %v708 = vld [vmem:[%s705 + $0x10] sm:$0xff]
        %v709 = vld [vmem:[%s705 + $0x18] sm:$0xff]
        %v710 = vld [vmem:[%s705 + $0x20] sm:$0x33]
        %v716 = vunpack.c.l.b16 %v706
        %v717 = vunpack.c.h.b16 %v706
        %v718 = vunpack.c.l.b16 %v707
        %v719 = vunpack.c.h.b16 %v707
        %v720 = vunpack.c.l.b16 %v708
        %v721 = vunpack.c.h.b16 %v708
        %v722 = vunpack.c.l.b16 %v709
        %v723 = vunpack.c.h.b16 %v709
        %v724 = vunpack.c.l.b16 %v710
        %v725 = vunpack.c.h.b16 %v710
        %v726 = vpack.c.b16 %v718, %v716
        %v727 = vpack.c.b16 %v719, %v717
        %v728 = vpack.c.b16 %v722, %v720
        %v729 = vpack.c.b16 %v723, %v721
        %v730 = vpack.c.b16 %v724, %v724
        %v731 = vpack.c.b16 %v725, %v725
        %v737 = vsel %vm537, %v704, 0
        %v740 = vsel %vm541, %v730, 0
        %v743 = vsel %vm541, %v731, 0
        %745 = vmatpush.bf16.msra.mxu0 0
        %746 = vmatpush.bf16.msra.mxu0 0
        %747 = vmatpush.bf16.msra.mxu0 0
        %748 = vmatpush.bf16.msra.mxu0 0
        %749 = vmatpush.bf16.msra.mxu0 0
        %750 = vmatpush.bf16.msra.mxu0 %v740
        %751 = vmatpush.bf16.msra.mxu0 %v728
        %752 = vmatpush.bf16.msra.mxu0 %v726
        %753 = vmatmul.bf16.gmra.mxu0 %v737
        %v754 = vpop.f32.mrf.mxu0
        %v755 = vadd.f32 0.0, %v754
        %v756 = vpop.f32.mrf.mxu0
        %757 = vdwg.mxu0
        %758 = vmatpush.bf16.msra.mxu0 0
        %759 = vmatpush.bf16.msra.mxu0 0
        %760 = vmatpush.bf16.msra.mxu0 0
        %761 = vmatpush.bf16.msra.mxu0 0
        %762 = vmatpush.bf16.msra.mxu0 0
        %763 = vmatpush.bf16.msra.mxu0 %v743
        %764 = vmatpush.bf16.msra.mxu0 %v729
        %765 = vmatpush.bf16.msra.mxu0 %v727
        %766 = vmatmul.bf16.gmra.mxu0 %v737
        %v767 = vpop.f32.mrf.mxu0
        %v768 = vadd.f32 0.0, %v767
        %v769 = vpop.f32.mrf.mxu0
        %770 = vdwg.mxu0
        %v771 = vpack.c.bf16 %v473, %v473
        %s772 = scalar_lea.vmem %s3, 3
        %v773 = vld [vmem:[%s772] sm:$0x1]
        %s774 = scalar_lea.vmem %s4, 6
        %v775 = vld [vmem:[%s774] sm:$0x3]
        %777 = vset.pattern.permute.xlu0 0
        %778 = vperm.xlu0 %777, %v775
        %v779 = vpop.permute.xlu0 %778
        %782 = vrot.lane.b32.xlu0 %v476, 20
        %v783 = vpop.permute.xlu0 %782
        %784 = vrot.lane.b32.xlu0 %v771, 20
        %v785 = vpop.permute.xlu0 %784
        %vm786 = vcmask 162816
        %v787 = vsel %vm786, %v783, %v785
        %v789 = vsel %vm484, %v773, 0
        %v792 = vsel %vm488, %v787, 0
        %794 = vmatpush.bf16.msra.mxu0 0
        %795 = vmatpush.bf16.msra.mxu0 0
        %796 = vmatpush.bf16.msra.mxu0 0
        %797 = vmatpush.bf16.msra.mxu0 0
        %798 = vmatpush.bf16.msra.mxu0 0
        %799 = vmatpush.bf16.msra.mxu0 0
        %800 = vmatpush.bf16.msra.mxu0 0
        %801 = vmatpush.bf16.msra.mxu0 %v792
        %802 = vmatmul.bf16.gmra.mxu0 %v789
        %v803 = vpop.f32.mrf.mxu0
        %v804 = vadd.f32 %v779, %v803
        %v805 = vpop.f32.mrf.mxu0
        %806 = vdwg.mxu0
        %v807 = vmax.f32 %v804, 0.0
        %v808 = vpack.c.bf16 %v807, %v807
        %s809 = scalar_lea.vmem %s2, 120
        %v810 = vld [vmem:[%s809] sm:$0xff]
        %v811 = vld [vmem:[%s809 + $0x8] sm:$0xff]
        %v812 = vld [vmem:[%s809 + $0x10] sm:$0xff]
        %v813 = vld [vmem:[%s809 + $0x18] sm:$0xff]
        %v814 = vld [vmem:[%s809 + $0x20] sm:$0x33]
        %v820 = vunpack.c.l.b16 %v810
        %v821 = vunpack.c.h.b16 %v810
        %v822 = vunpack.c.l.b16 %v811
        %v823 = vunpack.c.h.b16 %v811
        %v824 = vunpack.c.l.b16 %v812
        %v825 = vunpack.c.h.b16 %v812
        %v826 = vunpack.c.l.b16 %v813
        %v827 = vunpack.c.h.b16 %v813
        %v828 = vunpack.c.l.b16 %v814
        %v829 = vunpack.c.h.b16 %v814
        %v830 = vpack.c.b16 %v822, %v820
        %v831 = vpack.c.b16 %v823, %v821
        %v832 = vpack.c.b16 %v826, %v824
        %v833 = vpack.c.b16 %v827, %v825
        %v834 = vpack.c.b16 %v828, %v828
        %v835 = vpack.c.b16 %v829, %v829
        %v841 = vsel %vm537, %v808, 0
        %v844 = vsel %vm541, %v834, 0
        %v847 = vsel %vm541, %v835, 0
        %849 = vmatpush.bf16.msra.mxu0 0
        %850 = vmatpush.bf16.msra.mxu0 0
        %851 = vmatpush.bf16.msra.mxu0 0
        %852 = vmatpush.bf16.msra.mxu0 0
        %853 = vmatpush.bf16.msra.mxu0 0
        %854 = vmatpush.bf16.msra.mxu0 %v844
        %855 = vmatpush.bf16.msra.mxu0 %v832
        %856 = vmatpush.bf16.msra.mxu0 %v830
        %857 = vmatmul.bf16.gmra.mxu0 %v841
        %v858 = vpop.f32.mrf.mxu0
        %v859 = vadd.f32 0.0, %v858
        %v860 = vpop.f32.mrf.mxu0
        %861 = vdwg.mxu0
        %862 = vmatpush.bf16.msra.mxu0 0
        %863 = vmatpush.bf16.msra.mxu0 0
        %864 = vmatpush.bf16.msra.mxu0 0
        %865 = vmatpush.bf16.msra.mxu0 0
        %866 = vmatpush.bf16.msra.mxu0 0
        %867 = vmatpush.bf16.msra.mxu0 %v847
        %868 = vmatpush.bf16.msra.mxu0 %v833
        %869 = vmatpush.bf16.msra.mxu0 %v831
        %870 = vmatmul.bf16.gmra.mxu0 %v841
        %v871 = vpop.f32.mrf.mxu0
        %v872 = vadd.f32 0.0, %v871
        %v873 = vpop.f32.mrf.mxu0
        %874 = vdwg.mxu0
        %v875 = vunpack.c.l.bf16 %v224
        %v876 = vunpack.c.h.bf16 %v224
        %v879 = vrot.slane %v657, 6
        %v880 = vrot.slane %v670, 6
        %v885 = vrot.slane %v755, 4
        %v886 = vrot.slane %v768, 4
        %v891 = vrot.slane %v859, 2
        %v892 = vrot.slane %v872, 2
        %v895 = vsel %vm541, %v558, %v879
        %v896 = vsel %vm541, %v571, %v880
        %v897 = vsel %vm488, %v895, %v885
        %v898 = vsel %vm488, %v896, %v886
        %vm899 = vcmask 1045504
        %v900 = vsel %vm899, %v897, %v891
        %v901 = vsel %vm899, %v898, %v892
        %902 = vst [vmem:[%s217] sm:$0xff] %v900
        %903 = vst [vmem:[%s217 + $0x8] sm:$0xff] %v901
        %904 = vst [vmem:[%s217 + $0x10] sm:$0xff] %v875
        %905 = vst [vmem:[%s217 + $0x18] sm:$0xff] %v876
        %s906 = sand.u32 %s137, 1
        %s907 = scalar_lea.sflag [#allocation3], %s906
        %s908 = sand.u32 %s137, 1
        %s909 = smul.addr %s908, 32
        %s910 = scalar_lea.vmem [#allocation2], %s909
        // Predicated region
        $region41: #{tpu_custom_call.1} parent=39 // pred_check
          %p911 = pneg %p147
        $region42: #{tpu_custom_call.1} parent=39 // pred_check_branch
          %913 = sbr.rel (%p911) target = $region44
        $region43: #{tpu_custom_call.1} parent=39 // pred_region
          %915 = vsyncadd %s907, 0
          %s916 = smul.addr %s19, 4
          %s917 = smul.addr %s916, 8
          %s918 = scalar_lea.hbm %s5, %s917
          %s919 = sshll.u32 %s910, 4
          %s920 = int_to_ptr.vmem [resolvable:$true] %s919
          %s921 = sshll.u32 %s918, 4
          %s922 = int_to_ptr.hbm [resolvable:$true] %s921
          %927 = dma.vmem_to_hbm [thread:$0]  %s920, 512, %s922, %s907, 256, 256, 16
        $region44: #{tpu_custom_call.1} parent=39 // pred_fallthru
          _
      $region40: #{tpu_custom_call.1} parent=5 // pred_fallthru
        _
      %p928 = scmp.le.s32.totalorder 2, %s14
      // Predicated region
      $region45: #{tpu_custom_call.1} parent=5 // pred_check
        %p929 = pneg %p928
      $region46: #{tpu_custom_call.1} parent=5 // pred_check_branch
        %931 = sbr.rel (%p929) target = $region48
      $region47: #{tpu_custom_call.1} parent=5 // pred_region
        %s932 = ssub.s32 %s14, 2
        // Predicated region
        $region49: #{tpu_custom_call.1} parent=47 // pred_check
          %p933 = pneg %p153
        $region50: #{tpu_custom_call.1} parent=47 // pred_check_branch
          %935 = sbr.rel (%p933) target = $region52
        $region51: #{tpu_custom_call.1} parent=47 // pred_region
          %s936 = sand.u32 %s138, 1
          %s937 = scalar_lea.sflag [#allocation3], %s936
          %s938 = sand.u32 %s138, 1
          %s939 = smul.addr %s938, 32
          %s940 = scalar_lea.vmem [#allocation2], %s939
          %942 = dma.done %s937, 512
        $region52: #{tpu_custom_call.1} parent=47 // pred_fallthru
          _
      $region48: #{tpu_custom_call.1} parent=5 // pred_fallthru
        _
    $region6: #{tpu_custom_call.1} parent=1 // loop_footer
      %s18 = sadd.s32 1, %s14
    $region7: #{tpu_custom_call.1} parent=1 // loop_footer_branch
      %13 = sbr.rel target = $region3
    $region8: #{tpu_custom_call.1} parent=1 // loop_exit
      _
    %943 = vsyncpa [#allocation3], 1
    %s944 = scalar_lea.sflag [#allocation3], 1
    %945 = vsyncpa %s944, 1

</llo_original>
